<compile_context>
chip_gen: v6e
topology: v6e:2x2x1
jax: 0.10.0
libtpu: 0.0.40
codegen_flags: <defaults>
</compile_context>

<pallas_src>
import functools

import jax
import jax.numpy as jnp
from jax.experimental import pallas as pl
from jax.experimental.pallas import tpu as pltpu

N_EMBD = 32


def _round_up(n, m):
    return ((n + m - 1) // m) * m


def _num_tensorcores():
    """Best-effort TensorCore count (v7x: 2/chip, v5e/v6e: 1).  Defaults to 1."""
    try:
        info = pltpu.get_tpu_info()
        for attr in ("num_cores", "core_count", "num_tensorcores", "tensorcore_count"):
            n = getattr(info, attr, None)
            if isinstance(n, int) and n > 0:
                return n
    except Exception:
        pass
    try:
        n = getattr(jax.devices()[0], "num_cores", None)
        if isinstance(n, int) and n > 0:
            return n
    except Exception:
        pass
    return 1


def _block_diag(w, pack):
    """[kin, kout] -> block-diagonal [pack*kin, pack*kout] (pack copies of w)."""
    if pack == 1:
        return w
    kin, kout = w.shape
    eye = jnp.eye(pack, dtype=w.dtype)
    bd = jnp.einsum("pq,io->piqo", eye, w)  # [pack, kin, pack, kout]
    return bd.reshape(pack * kin, pack * kout)


def pack_ffwd_params(w1, b1, w2, b2):
    """One-time weight preprocessing (hoisted out of the per-call path)."""
    C = w1.shape[0]
    pack = 128 // C if (C < 128 and 128 % C == 0) else 1
    w1p = _block_diag(w1, pack).astype(jnp.bfloat16)
    w2p = _block_diag(w2, pack).astype(jnp.bfloat16)
    b1p = jnp.tile(b1.reshape(1, -1), (1, pack)).astype(jnp.float32)
    b2p = jnp.tile(b2.reshape(1, -1), (1, pack)).astype(jnp.float32)
    return w1p, b1p, w2p, b2p


def ffwd_kernel(x_ref, w1_ref, b1_ref, w2_ref, b2_ref, o_ref):
    # x_ref:  [tr, pack*C]  f32 (token-packed, lane dense)
    # w1_ref: [pack*C, pack*H] bf16 (block-diag)   b1_ref: [1, pack*H] f32
    # w2_ref: [pack*H, pack*C] bf16 (block-diag)   b2_ref: [1, pack*C] f32
    x = x_ref[...].astype(jnp.bfloat16)
    h = jnp.dot(x, w1_ref[...], preferred_element_type=jnp.float32)
    h = jnp.maximum(h + b1_ref[...], 0.0)  # bias + ReLU in f32 (VPU)
    y = jnp.dot(h.astype(jnp.bfloat16), w2_ref[...],
                preferred_element_type=jnp.float32)
    o_ref[...] = (y + b2_ref[...]).astype(o_ref.dtype)


def feed_forward_packed(x, w1p, b1p, w2p, b2p, *, tile_m=16384):
    """x: [B, T, C] f32 -> [B, T, C], using pre-packed weights."""
    B, T, C = x.shape
    lane_c, lane_h = w1p.shape  # (pack*C, pack*H)
    pack = lane_c // C
    M = B * T

    # Lane-pack tokens. Only a tiny (<= pack-1 row) pad to make M divisible by
    # pack -- the per-tile padding copy from the previous version is gone.
    x2d = x.reshape(M, C)
    pad = (-M) % pack
    if pad:
        x2d = jnp.pad(x2d, ((0, pad), (0, 0)))
    r = (M + pad) // pack
    xp = x2d.reshape(r, lane_c)

    # Row tile: as large as possible to amortize the ~0.35us per-step grid
    # overhead, but capped at 4096 rows (2 MiB/block) so the double-buffered
    # x+out blocks plus resident weights stay well under v7x's VMEM.
    cap = min(_round_up(max(8, tile_m // pack), 8), 4096)
    if r <= cap:
        tr = r                    # single block == full array dim (always legal)
    else:
        tr = cap                  # multiple of 8; Pallas handles ragged last block
    steps = pl.cdiv(r, tr)

    # Only split a single-tile workload when there are >=2 TensorCores (v7x);
    # on dual-TC chips prefer an even, >=4-step grid so both cores pipeline.
    if _num_tensorcores() >= 2:
        if steps == 1 and r >= 64:
            tr = max(8, _round_up(pl.cdiv(r, 4), 8))
            steps = pl.cdiv(r, tr)
        if steps > 1 and steps % 2 == 1:
            tr = max(8, _round_up(pl.cdiv(r, steps + 1), 8))
            steps = pl.cdiv(r, tr)

    out = pl.pallas_call(
        ffwd_kernel,
        out_shape=jax.ShapeDtypeStruct((r, lane_c), x.dtype),
        grid_spec=pltpu.PrefetchScalarGridSpec(
            num_scalar_prefetch=0,
            grid=(steps,),
            in_specs=[
                pl.BlockSpec((tr, lane_c), lambda i: (i, 0)),       # x tile (streamed)
                pl.BlockSpec((lane_c, lane_h), lambda i: (0, 0)),   # W1 (VMEM resident)
                pl.BlockSpec((1, lane_h), lambda i: (0, 0)),        # b1
                pl.BlockSpec((lane_h, lane_c), lambda i: (0, 0)),   # W2 (VMEM resident)
                pl.BlockSpec((1, lane_c), lambda i: (0, 0)),        # b2
            ],
            out_specs=pl.BlockSpec((tr, lane_c), lambda i: (i, 0)),
        ),
        compiler_params=pltpu.CompilerParams(
            dimension_semantics=("parallel",),
            vmem_limit_bytes=32 * 1024 * 1024,  # safe guardrail on all generations
        ),
    )(xp, w1p, b1p, w2p, b2p)

    return out.reshape(r * pack, C)[:M].reshape(B, T, C)


def feed_forward(x, w1, b1, w2, b2, *, tile_m=16384):
    """Convenience wrapper: packs weights every call (prefer FeedForward)."""
    w1p, b1p, w2p, b2p = pack_ffwd_params(w1, b1, w2, b2)
    return feed_forward_packed(x, w1p, b1p, w2p, b2p, tile_m=tile_m)


class FeedForward:
    """y = Linear(4C->C)(ReLU(Linear(C->4C)(x))) applied per token.

    Weights are packed (block-diag, bf16) once at construction; the jitted
    forward only streams activations.
    """

    def __init__(self, w1, b1, w2, b2, *, tile_m=16384):
        self.w1p, self.b1p, self.w2p, self.b2p = pack_ffwd_params(w1, b1, w2, b2)
        self._fwd = jax.jit(functools.partial(feed_forward_packed, tile_m=tile_m))

    def __call__(self, x):
        return self._fwd(x, self.w1p, self.b1p, self.w2p, self.b2p)


def init_params(key, n_embd=N_EMBD):
    """Deterministic init matching nn.Linear shapes (W stored as [in, out])."""
    h = 4 * n_embd
    k1, k2, k3, k4 = jax.random.split(key, 4)
    bound1 = 1.0 / jnp.sqrt(n_embd)
    bound2 = 1.0 / jnp.sqrt(h)
    w1 = jax.random.uniform(k1, (n_embd, h), jnp.float32, -bound1, bound1)
    b1 = jax.random.uniform(k2, (1, h), jnp.float32, -bound1, bound1)
    w2 = jax.random.uniform(k3, (h, n_embd), jnp.float32, -bound2, bound2)
    b2 = jax.random.uniform(k4, (1, n_embd), jnp.float32, -bound2, bound2)
    return w1, b1, w2, b2


if __name__ == "__main__":
    key = jax.random.PRNGKey(0)
    kx, kp, kx2 = jax.random.split(key, 3)

    w1, b1, w2, b2 = init_params(kp)
    ffwd = FeedForward(w1, b1, w2, b2)

    def reference(xx):
        C = xx.shape[-1]
        y = jnp.maximum(xx.reshape(-1, C) @ w1 + b1, 0.0) @ w2 + b2
        return y.reshape(xx.shape)

    # Test 1: small shape consistent with the module (B=2, T=8, C=32).
    B, T, C = 2, 8, N_EMBD
    x = jax.random.normal(kx, (B, T, C), jnp.float32)
    y = jax.block_until_ready(ffwd(x))
    assert y.shape == (B, T, C)
    assert jnp.allclose(y, reference(x), atol=2e-2, rtol=2e-2), "mismatch (test 1)"

    # Test 2: exercise the multi-step grid + ragged last block path.
    x2 = jax.random.normal(kx2, (2, 100, C), jnp.float32)
    y2 = jax.block_until_ready(
        feed_forward_packed(x2, ffwd.w1p, ffwd.b1p, ffwd.w2p, ffwd.b2p, tile_m=64))
    assert jnp.allclose(y2, reference(x2), atol=2e-2, rtol=2e-2), "mismatch (test 2)"

    print("KERNEL_OK")
</pallas_src>

<mosaic_0001>
module attributes {stable_mosaic.version = 11 : i64} {
  func.func @ffwd_kernel(%arg0: i32, %arg1: memref<4x128xf32, #tpu.memory_space<vmem>>, %arg2: memref<128x512xbf16, #tpu.memory_space<vmem>>, %arg3: memref<1x512xf32, #tpu.memory_space<vmem>>, %arg4: memref<512x128xbf16, #tpu.memory_space<vmem>>, %arg5: memref<1x128xf32, #tpu.memory_space<vmem>>, %arg6: memref<4x128xf32, #tpu.memory_space<vmem>>) attributes {dimension_semantics = [#tpu.dimension_semantics<parallel>], iteration_bounds = array<i64: 1>, scalar_prefetch = 0 : i64, scratch_operands = 0 : i64, tpu.core_type = #tpu.core_type<tc>, window_params = [{transform_indices = @transform_0, window_bounds = array<i64: 4, 128>}, {pipeline_mode = #tpu.pipeline_mode<synchronous>, transform_indices = @transform_1, window_bounds = array<i64: 128, 512>}, {pipeline_mode = #tpu.pipeline_mode<synchronous>, transform_indices = @transform_2, window_bounds = array<i64: 1, 512>}, {pipeline_mode = #tpu.pipeline_mode<synchronous>, transform_indices = @transform_3, window_bounds = array<i64: 512, 128>}, {pipeline_mode = #tpu.pipeline_mode<synchronous>, transform_indices = @transform_4, window_bounds = array<i64: 1, 128>}, {transform_indices = @transform_5, window_bounds = array<i64: 4, 128>}]} {
    %c0 = arith.constant 0 : index
    %c0_0 = arith.constant 0 : index
    %0 = vector.load %arg1[%c0, %c0_0] : memref<4x128xf32, #tpu.memory_space<vmem>>, vector<4x128xf32>
    %1 = arith.truncf %0 : vector<4x128xf32> to vector<4x128xbf16>
    %c0_1 = arith.constant 0 : index
    %c0_2 = arith.constant 0 : index
    %2 = vector.load %arg2[%c0_1, %c0_2] : memref<128x512xbf16, #tpu.memory_space<vmem>>, vector<128x512xbf16>
    %cst = arith.constant dense<0.000000e+00> : vector<4x512xf32>
    %3 = tpu.matmul %1, %2, %cst {dimension_numbers = #tpu.dot_dimension_numbers<[1], [0], [0], [1], [0, 0, 1, 1], [], []>} : vector<4x128xbf16>, vector<128x512xbf16>, vector<4x512xf32> -> vector<4x512xf32>
    %c0_3 = arith.constant 0 : index
    %c0_4 = arith.constant 0 : index
    %4 = vector.load %arg3[%c0_3, %c0_4] : memref<1x512xf32, #tpu.memory_space<vmem>>, vector<1x512xf32>
    %5 = vector.broadcast %4 : vector<1x512xf32> to vector<4x512xf32>
    %6 = arith.addf %3, %5 : vector<4x512xf32>
    %cst_5 = arith.constant 0.000000e+00 : f32
    %7 = vector.broadcast %cst_5 : f32 to vector<4x512xf32>
    %8 = arith.maximumf %6, %7 : vector<4x512xf32>
    %9 = arith.truncf %8 : vector<4x512xf32> to vector<4x512xbf16>
    %c0_6 = arith.constant 0 : index
    %c0_7 = arith.constant 0 : index
    %10 = vector.load %arg4[%c0_6, %c0_7] : memref<512x128xbf16, #tpu.memory_space<vmem>>, vector<512x128xbf16>
    %cst_8 = arith.constant dense<0.000000e+00> : vector<4x128xf32>
    %11 = tpu.matmul %9, %10, %cst_8 {dimension_numbers = #tpu.dot_dimension_numbers<[1], [0], [0], [1], [0, 0, 1, 1], [], []>} : vector<4x512xbf16>, vector<512x128xbf16>, vector<4x128xf32> -> vector<4x128xf32>
    %c0_9 = arith.constant 0 : index
    %c0_10 = arith.constant 0 : index
    %12 = vector.load %arg5[%c0_9, %c0_10] : memref<1x128xf32, #tpu.memory_space<vmem>>, vector<1x128xf32>
    %13 = vector.broadcast %12 : vector<1x128xf32> to vector<4x128xf32>
    %14 = arith.addf %11, %13 : vector<4x128xf32>
    %c0_11 = arith.constant 0 : index
    %c0_12 = arith.constant 0 : index
    %15 = vector.load %arg6[%c0_11, %c0_12] : memref<4x128xf32, #tpu.memory_space<vmem>>, vector<4x128xf32>
    tpu.vector_store %arg6[%c0_11, %c0_12], %14 {strides = array<i32>} : memref<4x128xf32, #tpu.memory_space<vmem>>, vector<4x128xf32>,
    return
  }
  func.func @transform_0(%arg0: i32) -> (i32, i32) {
    %c0_i32 = arith.constant 0 : i32
    %c0_i32_0 = arith.constant 0 : i32
    return %arg0, %c0_i32 : i32, i32
  }
  func.func @transform_1(%arg0: i32) -> (i32, i32) {
    %c0_i32 = arith.constant 0 : i32
    %c0_i32_0 = arith.constant 0 : i32
    %c0_i32_1 = arith.constant 0 : i32
    return %c0_i32, %c0_i32_0 : i32, i32
  }
  func.func @transform_2(%arg0: i32) -> (i32, i32) {
    %c0_i32 = arith.constant 0 : i32
    %c0_i32_0 = arith.constant 0 : i32
    %c0_i32_1 = arith.constant 0 : i32
    return %c0_i32, %c0_i32_0 : i32, i32
  }
  func.func @transform_3(%arg0: i32) -> (i32, i32) {
    %c0_i32 = arith.constant 0 : i32
    %c0_i32_0 = arith.constant 0 : i32
    %c0_i32_1 = arith.constant 0 : i32
    return %c0_i32, %c0_i32_0 : i32, i32
  }
  func.func @transform_4(%arg0: i32) -> (i32, i32) {
    %c0_i32 = arith.constant 0 : i32
    %c0_i32_0 = arith.constant 0 : i32
    %c0_i32_1 = arith.constant 0 : i32
    return %c0_i32, %c0_i32_0 : i32, i32
  }
  func.func @transform_5(%arg0: i32) -> (i32, i32) {
    %c0_i32 = arith.constant 0 : i32
    %c0_i32_0 = arith.constant 0 : i32
    return %arg0, %c0_i32 : i32, i32
  }
}

</mosaic_0001>

<llo_original>
// kernel: feed_forward_packed.1
$region0: #{feed_forward_packed.1}
  #allocation0 [shape = 'u32[]', space=smem, size = 0x4, offset = 0x4, fixed_abs, tag = 'smem constant byte address 0x4 - core index']
  #allocation1 [shape = 'u32[144,128]{1,0:T(1,128)}', space=vmem, size = 0x12000, scoped, tag = 'internal scratch']
  %s0 = inlined_call_operand.vmem [shape: f32[4,128], index: 0, kind: input, shape index: {}]
  %s1 = inlined_call_operand.hbm [shape: bf16[128,512], index: 1, kind: input, shape index: {}]
  %s2 = inlined_call_operand.vmem [shape: f32[1,512], index: 2, kind: input, shape index: {}]
  %s3 = inlined_call_operand.hbm [shape: bf16[512,128], index: 3, kind: input, shape index: {}]
  %s4 = inlined_call_operand.vmem [shape: f32[1,128], index: 4, kind: input, shape index: {}]
  %s5 = inlined_call_operand.vmem [shape: f32[4,128], index: 5, kind: output, shape index: {}]
  %s6 = sld [smem:[#allocation0]]
  $region38: #{feed_forward_packed.1} parent=0
    _
  %s8 = ssub.s32 1, %s6
  %s9 = scalar_select 0, %s8, %s6
  $region1: #{feed_forward_packed.1} parent=0
    #allocation2 [shape = 'u8[131072]{0}', space=vmem, size = 0x20000, scoped, tag = 'input window, operand 1, single buffered']
    #allocation3 [shape = 's32[1]{0}', space=sflag, size = 0x4, scoped, tag = 'scoped memory for feed_forward_packed.1']
    #allocation4 [shape = 'u8[131072]{0}', space=vmem, size = 0x20000, scoped, tag = 'input window, operand 3, single buffered']
    #allocation5 [shape = 's32[1]{0}', space=sflag, size = 0x4, scoped, tag = 'scoped memory for feed_forward_packed.1']
    %10 = vsyncpa [#allocation3], 0
    %11 = vsyncpa [#allocation5], 0
    // Predicated region
    $region2: #{feed_forward_packed.1} parent=1 // pred_check
      _
    $region3: #{feed_forward_packed.1} parent=1 // pred_check_branch
      %13 = sbr.rel (0) target = $region5
    $region4: #{feed_forward_packed.1} parent=1 // pred_region
      _
    $region5: #{feed_forward_packed.1} parent=1 // pred_fallthru
      _
    // Predicated region
    $region6: #{feed_forward_packed.1} parent=1 // pred_check
      _
    $region7: #{feed_forward_packed.1} parent=1 // pred_check_branch
      %15 = sbr.rel (0) target = $region9
    $region8: #{feed_forward_packed.1} parent=1 // pred_region
      %s17 = ssub.s32 4096, 4096
      %18 = vsyncadd [#allocation3], %s17
      %s19 = sshll.u32 [#allocation2], 4
      %s20 = int_to_ptr.vmem [resolvable:$true] %s19
      %25 = dma.hbm_to_vmem [thread:$0]  %s1, 4096, %s20, [#allocation3], 256, 256, 16
    $region9: #{feed_forward_packed.1} parent=1 // pred_fallthru
      _
    // Predicated region
    $region10: #{feed_forward_packed.1} parent=1 // pred_check
      _
    $region11: #{feed_forward_packed.1} parent=1 // pred_check_branch
      %27 = sbr.rel (0) target = $region13
    $region12: #{feed_forward_packed.1} parent=1 // pred_region
      _
    $region13: #{feed_forward_packed.1} parent=1 // pred_fallthru
      _
    // Predicated region
    $region14: #{feed_forward_packed.1} parent=1 // pred_check
      _
    $region15: #{feed_forward_packed.1} parent=1 // pred_check_branch
      %29 = sbr.rel (0) target = $region17
    $region16: #{feed_forward_packed.1} parent=1 // pred_region
      %s31 = ssub.s32 4096, 4096
      %32 = vsyncadd [#allocation5], %s31
      %s33 = sshll.u32 [#allocation4], 4
      %s34 = int_to_ptr.vmem [resolvable:$true] %s33
      %39 = dma.hbm_to_vmem [thread:$0]  %s3, 4096, %s34, [#allocation5], 64, 64, 4
    $region17: #{feed_forward_packed.1} parent=1 // pred_fallthru
      _
    // Predicated region
    $region18: #{feed_forward_packed.1} parent=1 // pred_check
      _
    $region19: #{feed_forward_packed.1} parent=1 // pred_check_branch
      %41 = sbr.rel (0) target = $region21
    $region20: #{feed_forward_packed.1} parent=1 // pred_region
      _
    $region21: #{feed_forward_packed.1} parent=1 // pred_fallthru
      _
    // Predicated region
    $region22: #{feed_forward_packed.1} parent=1 // pred_check
      _
    $region23: #{feed_forward_packed.1} parent=1 // pred_check_branch
      %43 = sbr.rel (0) target = $region25
    $region24: #{feed_forward_packed.1} parent=1 // pred_region
      %44 = dma.done [#allocation3], 4096
    $region25: #{feed_forward_packed.1} parent=1 // pred_fallthru
      _
    // Predicated region
    $region26: #{feed_forward_packed.1} parent=1 // pred_check
      _
    $region27: #{feed_forward_packed.1} parent=1 // pred_check_branch
      %46 = sbr.rel (0) target = $region29
    $region28: #{feed_forward_packed.1} parent=1 // pred_region
      %47 = dma.done [#allocation5], 4096
    $region29: #{feed_forward_packed.1} parent=1 // pred_fallthru
      _
    %v49 = vld [vmem:[%s0] sm:$0xf]
    %v50 = vpack.c.bf16 %v49, %v49
    %v51 = vld [vmem:[#allocation2] sm:$0xff]
    %v52 = vld [vmem:[#allocation2 + $0x8] sm:$0xff]
    %v53 = vld [vmem:[#allocation2 + $0x10] sm:$0xff]
    %v54 = vld [vmem:[#allocation2 + $0x18] sm:$0xff]
    %v55 = vld [vmem:[#allocation2 + $0x20] sm:$0xff]
    %v56 = vld [vmem:[#allocation2 + $0x28] sm:$0xff]
    %v57 = vld [vmem:[#allocation2 + $0x30] sm:$0xff]
    %v58 = vld [vmem:[#allocation2 + $0x38] sm:$0xff]
    %v59 = vld [vmem:[#allocation2 + $0x40] sm:$0xff]
    %v60 = vld [vmem:[#allocation2 + $0x48] sm:$0xff]
    %v61 = vld [vmem:[#allocation2 + $0x50] sm:$0xff]
    %v62 = vld [vmem:[#allocation2 + $0x58] sm:$0xff]
    %v63 = vld [vmem:[#allocation2 + $0x60] sm:$0xff]
    %v64 = vld [vmem:[#allocation2 + $0x68] sm:$0xff]
    %v65 = vld [vmem:[#allocation2 + $0x70] sm:$0xff]
    %v66 = vld [vmem:[#allocation2 + $0x78] sm:$0xff]
    %v67 = vld [vmem:[#allocation2 + $0x80] sm:$0xff]
    %v68 = vld [vmem:[#allocation2 + $0x88] sm:$0xff]
    %v69 = vld [vmem:[#allocation2 + $0x90] sm:$0xff]
    %v70 = vld [vmem:[#allocation2 + $0x98] sm:$0xff]
    %v71 = vld [vmem:[#allocation2 + $0xa0] sm:$0xff]
    %v72 = vld [vmem:[#allocation2 + $0xa8] sm:$0xff]
    %v73 = vld [vmem:[#allocation2 + $0xb0] sm:$0xff]
    %v74 = vld [vmem:[#allocation2 + $0xb8] sm:$0xff]
    %v75 = vld [vmem:[#allocation2 + $0xc0] sm:$0xff]
    %v76 = vld [vmem:[#allocation2 + $0xc8] sm:$0xff]
    %v77 = vld [vmem:[#allocation2 + $0xd0] sm:$0xff]
    %v78 = vld [vmem:[#allocation2 + $0xd8] sm:$0xff]
    %v79 = vld [vmem:[#allocation2 + $0xe0] sm:$0xff]
    %v80 = vld [vmem:[#allocation2 + $0xe8] sm:$0xff]
    %v81 = vld [vmem:[#allocation2 + $0xf0] sm:$0xff]
    %v82 = vld [vmem:[#allocation2 + $0xf8] sm:$0xff]
    %v83 = vld [vmem:[%s2] sm:$0xf]
    %v85 = vlaneseq
    %v86 = vshrl.u32 %v85, 7
    %v87 = vsub.s32 0, %v86
    %v88 = vrot.slane %v83, %v87
    %v89 = vlaneseq
    %v90 = vshrl.u32 %v89, 7
    %v91 = vsub.s32 1, %v90
    %v92 = vrot.slane %v83, %v91
    %v93 = vlaneseq
    %v94 = vshrl.u32 %v93, 7
    %v95 = vsub.s32 2, %v94
    %v96 = vrot.slane %v83, %v95
    %v97 = vlaneseq
    %v98 = vshrl.u32 %v97, 7
    %v99 = vsub.s32 3, %v98
    %v100 = vrot.slane %v83, %v99
    %v137 = vunpack.c.l.b16 %v51
    %v138 = vunpack.c.h.b16 %v51
    %v139 = vunpack.c.l.b16 %v52
    %v140 = vunpack.c.h.b16 %v52
    %v141 = vunpack.c.l.b16 %v53
    %v142 = vunpack.c.h.b16 %v53
    %v143 = vunpack.c.l.b16 %v54
    %v144 = vunpack.c.h.b16 %v54
    %v145 = vunpack.c.l.b16 %v55
    %v146 = vunpack.c.h.b16 %v55
    %v147 = vunpack.c.l.b16 %v56
    %v148 = vunpack.c.h.b16 %v56
    %v149 = vunpack.c.l.b16 %v57
    %v150 = vunpack.c.h.b16 %v57
    %v151 = vunpack.c.l.b16 %v58
    %v152 = vunpack.c.h.b16 %v58
    %v153 = vunpack.c.l.b16 %v59
    %v154 = vunpack.c.h.b16 %v59
    %v155 = vunpack.c.l.b16 %v60
    %v156 = vunpack.c.h.b16 %v60
    %v157 = vunpack.c.l.b16 %v61
    %v158 = vunpack.c.h.b16 %v61
    %v159 = vunpack.c.l.b16 %v62
    %v160 = vunpack.c.h.b16 %v62
    %v161 = vunpack.c.l.b16 %v63
    %v162 = vunpack.c.h.b16 %v63
    %v163 = vunpack.c.l.b16 %v64
    %v164 = vunpack.c.h.b16 %v64
    %v165 = vunpack.c.l.b16 %v65
    %v166 = vunpack.c.h.b16 %v65
    %v167 = vunpack.c.l.b16 %v66
    %v168 = vunpack.c.h.b16 %v66
    %v169 = vunpack.c.l.b16 %v67
    %v170 = vunpack.c.h.b16 %v67
    %v171 = vunpack.c.l.b16 %v68
    %v172 = vunpack.c.h.b16 %v68
    %v173 = vunpack.c.l.b16 %v69
    %v174 = vunpack.c.h.b16 %v69
    %v175 = vunpack.c.l.b16 %v70
    %v176 = vunpack.c.h.b16 %v70
    %v177 = vunpack.c.l.b16 %v71
    %v178 = vunpack.c.h.b16 %v71
    %v179 = vunpack.c.l.b16 %v72
    %v180 = vunpack.c.h.b16 %v72
    %v181 = vunpack.c.l.b16 %v73
    %v182 = vunpack.c.h.b16 %v73
    %v183 = vunpack.c.l.b16 %v74
    %v184 = vunpack.c.h.b16 %v74
    %v185 = vunpack.c.l.b16 %v75
    %v186 = vunpack.c.h.b16 %v75
    %v187 = vunpack.c.l.b16 %v76
    %v188 = vunpack.c.h.b16 %v76
    %v189 = vunpack.c.l.b16 %v77
    %v190 = vunpack.c.h.b16 %v77
    %v191 = vunpack.c.l.b16 %v78
    %v192 = vunpack.c.h.b16 %v78
    %v193 = vunpack.c.l.b16 %v79
    %v194 = vunpack.c.h.b16 %v79
    %v195 = vunpack.c.l.b16 %v80
    %v196 = vunpack.c.h.b16 %v80
    %v197 = vunpack.c.l.b16 %v81
    %v198 = vunpack.c.h.b16 %v81
    %v199 = vunpack.c.l.b16 %v82
    %v200 = vunpack.c.h.b16 %v82
    %v201 = vpack.c.b16 %v141, %v137
    %v202 = vpack.c.b16 %v142, %v138
    %v203 = vpack.c.b16 %v143, %v139
    %v204 = vpack.c.b16 %v144, %v140
    %v205 = vpack.c.b16 %v149, %v145
    %v206 = vpack.c.b16 %v150, %v146
    %v207 = vpack.c.b16 %v151, %v147
    %v208 = vpack.c.b16 %v152, %v148
    %v209 = vpack.c.b16 %v157, %v153
    %v210 = vpack.c.b16 %v158, %v154
    %v211 = vpack.c.b16 %v159, %v155
    %v212 = vpack.c.b16 %v160, %v156
    %v213 = vpack.c.b16 %v165, %v161
    %v214 = vpack.c.b16 %v166, %v162
    %v215 = vpack.c.b16 %v167, %v163
    %v216 = vpack.c.b16 %v168, %v164
    %v217 = vpack.c.b16 %v173, %v169
    %v218 = vpack.c.b16 %v174, %v170
    %v219 = vpack.c.b16 %v175, %v171
    %v220 = vpack.c.b16 %v176, %v172
    %v221 = vpack.c.b16 %v181, %v177
    %v222 = vpack.c.b16 %v182, %v178
    %v223 = vpack.c.b16 %v183, %v179
    %v224 = vpack.c.b16 %v184, %v180
    %v225 = vpack.c.b16 %v189, %v185
    %v226 = vpack.c.b16 %v190, %v186
    %v227 = vpack.c.b16 %v191, %v187
    %v228 = vpack.c.b16 %v192, %v188
    %v229 = vpack.c.b16 %v197, %v193
    %v230 = vpack.c.b16 %v198, %v194
    %v231 = vpack.c.b16 %v199, %v195
    %v232 = vpack.c.b16 %v200, %v196
    %265 = vmatprep.subr.bf16.mxu0 %v230
    %266 = vmatpush1.bf16.msra.mxu0 %v229
    %267 = vmatprep.subr.bf16.mxu0 %v226
    %268 = vmatpush1.bf16.msra.mxu0 %v225
    %269 = vmatprep.subr.bf16.mxu0 %v222
    %270 = vmatpush1.bf16.msra.mxu0 %v221
    %271 = vmatprep.subr.bf16.mxu0 %v218
    %272 = vmatpush1.bf16.msra.mxu0 %v217
    %273 = vmatprep.subr.bf16.mxu0 %v214
    %274 = vmatpush1.bf16.msra.mxu0 %v213
    %275 = vmatprep.subr.bf16.mxu0 %v210
    %276 = vmatpush1.bf16.msra.mxu0 %v209
    %277 = vmatprep.subr.bf16.mxu0 %v206
    %278 = vmatpush1.bf16.msra.mxu0 %v205
    %279 = vmatprep.subr.bf16.mxu0 %v202
    %280 = vmatpush1.bf16.msra.mxu0 %v201
    %281 = vmatprep.subr.bf16.mxu0 0
    %282 = vmatpush2.bf16.msra.mxu0 0
    %283 = vmatprep.subr.bf16.mxu0 0
    %284 = vmatpush2.bf16.msra.mxu0 0
    %285 = vmatprep.subr.bf16.mxu0 0
    %286 = vmatpush2.bf16.msra.mxu0 0
    %287 = vmatprep.subr.bf16.mxu0 0
    %288 = vmatpush2.bf16.msra.mxu0 0
    %289 = vmatprep.subr.bf16.mxu0 0
    %290 = vmatpush2.bf16.msra.mxu0 0
    %291 = vmatprep.subr.bf16.mxu0 0
    %292 = vmatpush2.bf16.msra.mxu0 0
    %293 = vmatprep.subr.bf16.mxu0 0
    %294 = vmatpush2.bf16.msra.mxu0 0
    %295 = vmatprep.subr.bf16.mxu0 0
    %296 = vmatpush2.bf16.msra.mxu0 0
    %297 = vmatprep.mubr.bf16.mxu0 0
    %298 = vmatmul.mubr.bf16.gmra.mxu0 %v50
    %v299 = vpop.f32.mrf.mxu0
    %v300 = vadd.f32 %v88, %v299
    %v301 = vpop.f32.mrf.mxu0
    %v302 = vadd.f32 %v92, %v301
    %v303 = vpop.f32.mrf.mxu0
    %v304 = vpop.f32.mrf.mxu0
    %305 = vdwg.mxu0
    %306 = vmatprep.subr.bf16.mxu0 %v232
    %307 = vmatpush1.bf16.msra.mxu0 %v231
    %308 = vmatprep.subr.bf16.mxu0 %v228
    %309 = vmatpush1.bf16.msra.mxu0 %v227
    %310 = vmatprep.subr.bf16.mxu0 %v224
    %311 = vmatpush1.bf16.msra.mxu0 %v223
    %312 = vmatprep.subr.bf16.mxu0 %v220
    %313 = vmatpush1.bf16.msra.mxu0 %v219
    %314 = vmatprep.subr.bf16.mxu0 %v216
    %315 = vmatpush1.bf16.msra.mxu0 %v215
    %316 = vmatprep.subr.bf16.mxu0 %v212
    %317 = vmatpush1.bf16.msra.mxu0 %v211
    %318 = vmatprep.subr.bf16.mxu0 %v208
    %319 = vmatpush1.bf16.msra.mxu0 %v207
    %320 = vmatprep.subr.bf16.mxu0 %v204
    %321 = vmatpush1.bf16.msra.mxu0 %v203
    %322 = vmatprep.subr.bf16.mxu0 0
    %323 = vmatpush2.bf16.msra.mxu0 0
    %324 = vmatprep.subr.bf16.mxu0 0
    %325 = vmatpush2.bf16.msra.mxu0 0
    %326 = vmatprep.subr.bf16.mxu0 0
    %327 = vmatpush2.bf16.msra.mxu0 0
    %328 = vmatprep.subr.bf16.mxu0 0
    %329 = vmatpush2.bf16.msra.mxu0 0
    %330 = vmatprep.subr.bf16.mxu0 0
    %331 = vmatpush2.bf16.msra.mxu0 0
    %332 = vmatprep.subr.bf16.mxu0 0
    %333 = vmatpush2.bf16.msra.mxu0 0
    %334 = vmatprep.subr.bf16.mxu0 0
    %335 = vmatpush2.bf16.msra.mxu0 0
    %336 = vmatprep.subr.bf16.mxu0 0
    %337 = vmatpush2.bf16.msra.mxu0 0
    %338 = vmatprep.mubr.bf16.mxu0 0
    %339 = vmatmul.mubr.bf16.gmra.mxu0 %v50
    %v340 = vpop.f32.mrf.mxu0
    %v341 = vadd.f32 %v96, %v340
    %v342 = vpop.f32.mrf.mxu0
    %v343 = vadd.f32 %v100, %v342
    %v344 = vpop.f32.mrf.mxu0
    %v345 = vpop.f32.mrf.mxu0
    %346 = vdwg.mxu0
    %v347 = vmax.f32 %v300, 0.0
    %v348 = vmax.f32 %v302, 0.0
    %v349 = vmax.f32 %v341, 0.0
    %v350 = vmax.f32 %v343, 0.0
    %v351 = vpack.c.bf16 %v347, %v347
    %v352 = vpack.c.bf16 %v348, %v348
    %v353 = vpack.c.bf16 %v349, %v349
    %v354 = vpack.c.bf16 %v350, %v350
    %v355 = vld [vmem:[#allocation4] sm:$0xf]
    %v356 = vld [vmem:[#allocation4 + $0x4] sm:$0xf]
    %v357 = vld [vmem:[#allocation4 + $0x8] sm:$0xf]
    %v358 = vld [vmem:[#allocation4 + $0xc] sm:$0xf]
    %v359 = vld [vmem:[#allocation4 + $0x10] sm:$0xf]
    %v360 = vld [vmem:[#allocation4 + $0x14] sm:$0xf]
    %v361 = vld [vmem:[#allocation4 + $0x18] sm:$0xf]
    %v362 = vld [vmem:[#allocation4 + $0x1c] sm:$0xf]
    %v363 = vld [vmem:[#allocation4 + $0x20] sm:$0xf]
    %v364 = vld [vmem:[#allocation4 + $0x24] sm:$0xf]
    %v365 = vld [vmem:[#allocation4 + $0x28] sm:$0xf]
    %v366 = vld [vmem:[#allocation4 + $0x2c] sm:$0xf]
    %v367 = vld [vmem:[#allocation4 + $0x30] sm:$0xf]
    %v368 = vld [vmem:[#allocation4 + $0x34] sm:$0xf]
    %v369 = vld [vmem:[#allocation4 + $0x38] sm:$0xf]
    %v370 = vld [vmem:[#allocation4 + $0x3c] sm:$0xf]
    %v371 = vld [vmem:[#allocation4 + $0x40] sm:$0xf]
    %v372 = vld [vmem:[#allocation4 + $0x44] sm:$0xf]
    %v373 = vld [vmem:[#allocation4 + $0x48] sm:$0xf]
    %v374 = vld [vmem:[#allocation4 + $0x4c] sm:$0xf]
    %v375 = vld [vmem:[#allocation4 + $0x50] sm:$0xf]
    %v376 = vld [vmem:[#allocation4 + $0x54] sm:$0xf]
    %v377 = vld [vmem:[#allocation4 + $0x58] sm:$0xf]
    %v378 = vld [vmem:[#allocation4 + $0x5c] sm:$0xf]
    %v379 = vld [vmem:[#allocation4 + $0x60] sm:$0xf]
    %v380 = vld [vmem:[#allocation4 + $0x64] sm:$0xf]
    %v381 = vld [vmem:[#allocation4 + $0x68] sm:$0xf]
    %v382 = vld [vmem:[#allocation4 + $0x6c] sm:$0xf]
    %v383 = vld [vmem:[#allocation4 + $0x70] sm:$0xf]
    %v384 = vld [vmem:[#allocation4 + $0x74] sm:$0xf]
    %v385 = vld [vmem:[#allocation4 + $0x78] sm:$0xf]
    %v386 = vld [vmem:[#allocation4 + $0x7c] sm:$0xf]
    %v387 = vld [vmem:[#allocation4 + $0x80] sm:$0xf]
    %v388 = vld [vmem:[#allocation4 + $0x84] sm:$0xf]
    %v389 = vld [vmem:[#allocation4 + $0x88] sm:$0xf]
    %v390 = vld [vmem:[#allocation4 + $0x8c] sm:$0xf]
    %v391 = vld [vmem:[#allocation4 + $0x90] sm:$0xf]
    %v392 = vld [vmem:[#allocation4 + $0x94] sm:$0xf]
    %v393 = vld [vmem:[#allocation4 + $0x98] sm:$0xf]
    %v394 = vld [vmem:[#allocation4 + $0x9c] sm:$0xf]
    %v395 = vld [vmem:[#allocation4 + $0xa0] sm:$0xf]
    %v396 = vld [vmem:[#allocation4 + $0xa4] sm:$0xf]
    %v397 = vld [vmem:[#allocation4 + $0xa8] sm:$0xf]
    %v398 = vld [vmem:[#allocation4 + $0xac] sm:$0xf]
    %v399 = vld [vmem:[#allocation4 + $0xb0] sm:$0xf]
    %v400 = vld [vmem:[#allocation4 + $0xb4] sm:$0xf]
    %v401 = vld [vmem:[#allocation4 + $0xb8] sm:$0xf]
    %v402 = vld [vmem:[#allocation4 + $0xbc] sm:$0xf]
    %v403 = vld [vmem:[#allocation4 + $0xc0] sm:$0xf]
    %v404 = vld [vmem:[#allocation4 + $0xc4] sm:$0xf]
    %v405 = vld [vmem:[#allocation4 + $0xc8] sm:$0xf]
    %v406 = vld [vmem:[#allocation4 + $0xcc] sm:$0xf]
    %v407 = vld [vmem:[#allocation4 + $0xd0] sm:$0xf]
    %v408 = vld [vmem:[#allocation4 + $0xd4] sm:$0xf]
    %v409 = vld [vmem:[#allocation4 + $0xd8] sm:$0xf]
    %v410 = vld [vmem:[#allocation4 + $0xdc] sm:$0xf]
    %v411 = vld [vmem:[#allocation4 + $0xe0] sm:$0xf]
    %v412 = vld [vmem:[#allocation4 + $0xe4] sm:$0xf]
    %v413 = vld [vmem:[#allocation4 + $0xe8] sm:$0xf]
    %v414 = vld [vmem:[#allocation4 + $0xec] sm:$0xf]
    %v415 = vld [vmem:[#allocation4 + $0xf0] sm:$0xf]
    %v416 = vld [vmem:[#allocation4 + $0xf4] sm:$0xf]
    %v417 = vld [vmem:[#allocation4 + $0xf8] sm:$0xf]
    %v418 = vld [vmem:[#allocation4 + $0xfc] sm:$0xf]
    %v419 = vld [vmem:[%s4] sm:$0x1]
    %v421 = vlaneseq
    %v422 = vshrl.u32 %v421, 7
    %v423 = vsub.s32 0, %v422
    %v424 = vrot.slane %v419, %v423
    %v490 = vunpack.c.l.b16 %v355
    %v491 = vunpack.c.l.b16 %v356
    %v492 = vunpack.c.l.b16 %v357
    %v493 = vunpack.c.l.b16 %v358
    %v494 = vunpack.c.l.b16 %v359
    %v495 = vunpack.c.l.b16 %v360
    %v496 = vunpack.c.l.b16 %v361
    %v497 = vunpack.c.l.b16 %v362
    %v498 = vunpack.c.l.b16 %v363
    %v499 = vunpack.c.l.b16 %v364
    %v500 = vunpack.c.l.b16 %v365
    %v501 = vunpack.c.l.b16 %v366
    %v502 = vunpack.c.l.b16 %v367
    %v503 = vunpack.c.l.b16 %v368
    %v504 = vunpack.c.l.b16 %v369
    %v505 = vunpack.c.l.b16 %v370
    %v506 = vunpack.c.l.b16 %v371
    %v507 = vunpack.c.l.b16 %v372
    %v508 = vunpack.c.l.b16 %v373
    %v509 = vunpack.c.l.b16 %v374
    %v510 = vunpack.c.l.b16 %v375
    %v511 = vunpack.c.l.b16 %v376
    %v512 = vunpack.c.l.b16 %v377
    %v513 = vunpack.c.l.b16 %v378
    %v514 = vunpack.c.l.b16 %v379
    %v515 = vunpack.c.l.b16 %v380
    %v516 = vunpack.c.l.b16 %v381
    %v517 = vunpack.c.l.b16 %v382
    %v518 = vunpack.c.l.b16 %v383
    %v519 = vunpack.c.l.b16 %v384
    %v520 = vunpack.c.l.b16 %v385
    %v521 = vunpack.c.l.b16 %v386
    %v522 = vunpack.c.l.b16 %v387
    %v523 = vunpack.c.l.b16 %v388
    %v524 = vunpack.c.l.b16 %v389
    %v525 = vunpack.c.l.b16 %v390
    %v526 = vunpack.c.l.b16 %v391
    %v527 = vunpack.c.l.b16 %v392
    %v528 = vunpack.c.l.b16 %v393
    %v529 = vunpack.c.l.b16 %v394
    %v530 = vunpack.c.l.b16 %v395
    %v531 = vunpack.c.l.b16 %v396
    %v532 = vunpack.c.l.b16 %v397
    %v533 = vunpack.c.l.b16 %v398
    %v534 = vunpack.c.l.b16 %v399
    %v535 = vunpack.c.l.b16 %v400
    %v536 = vunpack.c.l.b16 %v401
    %v537 = vunpack.c.l.b16 %v402
    %v538 = vunpack.c.l.b16 %v403
    %v539 = vunpack.c.l.b16 %v404
    %v540 = vunpack.c.l.b16 %v405
    %v541 = vunpack.c.l.b16 %v406
    %v542 = vunpack.c.l.b16 %v407
    %v543 = vunpack.c.l.b16 %v408
    %v544 = vunpack.c.l.b16 %v409
    %v545 = vunpack.c.l.b16 %v410
    %v546 = vunpack.c.l.b16 %v411
    %v547 = vunpack.c.l.b16 %v412
    %v548 = vunpack.c.l.b16 %v413
    %v549 = vunpack.c.l.b16 %v414
    %v550 = vunpack.c.l.b16 %v415
    %v551 = vunpack.c.l.b16 %v416
    %v552 = vunpack.c.l.b16 %v417
    %v553 = vunpack.c.l.b16 %v418
    %v554 = vpack.c.b16 %v491, %v490
    %v555 = vpack.c.b16 %v493, %v492
    %v556 = vpack.c.b16 %v495, %v494
    %v557 = vpack.c.b16 %v497, %v496
    %v558 = vpack.c.b16 %v499, %v498
    %v559 = vpack.c.b16 %v501, %v500
    %v560 = vpack.c.b16 %v503, %v502
    %v561 = vpack.c.b16 %v505, %v504
    %v562 = vpack.c.b16 %v507, %v506
    %v563 = vpack.c.b16 %v509, %v508
    %v564 = vpack.c.b16 %v511, %v510
    %v565 = vpack.c.b16 %v513, %v512
    %v566 = vpack.c.b16 %v515, %v514
    %v567 = vpack.c.b16 %v517, %v516
    %v568 = vpack.c.b16 %v519, %v518
    %v569 = vpack.c.b16 %v521, %v520
    %v570 = vpack.c.b16 %v523, %v522
    %v571 = vpack.c.b16 %v525, %v524
    %v572 = vpack.c.b16 %v527, %v526
    %v573 = vpack.c.b16 %v529, %v528
    %v574 = vpack.c.b16 %v531, %v530
    %v575 = vpack.c.b16 %v533, %v532
    %v576 = vpack.c.b16 %v535, %v534
    %v577 = vpack.c.b16 %v537, %v536
    %v578 = vpack.c.b16 %v539, %v538
    %v579 = vpack.c.b16 %v541, %v540
    %v580 = vpack.c.b16 %v543, %v542
    %v581 = vpack.c.b16 %v545, %v544
    %v582 = vpack.c.b16 %v547, %v546
    %v583 = vpack.c.b16 %v549, %v548
    %v584 = vpack.c.b16 %v551, %v550
    %v585 = vpack.c.b16 %v553, %v552
    %618 = vmatprep.subr.bf16.mxu0 0
    %619 = vmatpush1.bf16.msra.mxu0 %v561
    %620 = vmatprep.subr.bf16.mxu0 0
    %621 = vmatpush1.bf16.msra.mxu0 %v560
    %622 = vmatprep.subr.bf16.mxu0 0
    %623 = vmatpush1.bf16.msra.mxu0 %v559
    %624 = vmatprep.subr.bf16.mxu0 0
    %625 = vmatpush1.bf16.msra.mxu0 %v558
    %626 = vmatprep.subr.bf16.mxu0 0
    %627 = vmatpush1.bf16.msra.mxu0 %v557
    %628 = vmatprep.subr.bf16.mxu0 0
    %629 = vmatpush1.bf16.msra.mxu0 %v556
    %630 = vmatprep.subr.bf16.mxu0 0
    %631 = vmatpush1.bf16.msra.mxu0 %v555
    %632 = vmatprep.subr.bf16.mxu0 0
    %633 = vmatpush1.bf16.msra.mxu0 %v554
    %634 = vmatprep.subr.bf16.mxu0 0
    %635 = vmatpush2.bf16.msra.mxu0 %v569
    %636 = vmatprep.subr.bf16.mxu0 0
    %637 = vmatpush2.bf16.msra.mxu0 %v568
    %638 = vmatprep.subr.bf16.mxu0 0
    %639 = vmatpush2.bf16.msra.mxu0 %v567
    %640 = vmatprep.subr.bf16.mxu0 0
    %641 = vmatpush2.bf16.msra.mxu0 %v566
    %642 = vmatprep.subr.bf16.mxu0 0
    %643 = vmatpush2.bf16.msra.mxu0 %v565
    %644 = vmatprep.subr.bf16.mxu0 0
    %645 = vmatpush2.bf16.msra.mxu0 %v564
    %646 = vmatprep.subr.bf16.mxu0 0
    %647 = vmatpush2.bf16.msra.mxu0 %v563
    %648 = vmatprep.subr.bf16.mxu0 0
    %649 = vmatpush2.bf16.msra.mxu0 %v562
    %650 = vmatprep.mubr.bf16.mxu0 %v352
    %651 = vmatmul.mubr.bf16.gmra.mxu0 %v351
    %v652 = vpop.f32.mrf.mxu0
    %v653 = vadd.f32 %v424, %v652
    %v654 = vpop.f32.mrf.mxu0
    %v655 = vpop.f32.mrf.mxu0
    %v656 = vpop.f32.mrf.mxu0
    %657 = vdwg.mxu0
    %658 = vmatprep.subr.bf16.mxu0 0
    %659 = vmatpush1.bf16.msra.mxu0 %v577
    %660 = vmatprep.subr.bf16.mxu0 0
    %661 = vmatpush1.bf16.msra.mxu0 %v576
    %662 = vmatprep.subr.bf16.mxu0 0
    %663 = vmatpush1.bf16.msra.mxu0 %v575
    %664 = vmatprep.subr.bf16.mxu0 0
    %665 = vmatpush1.bf16.msra.mxu0 %v574
    %666 = vmatprep.subr.bf16.mxu0 0
    %667 = vmatpush1.bf16.msra.mxu0 %v573
    %668 = vmatprep.subr.bf16.mxu0 0
    %669 = vmatpush1.bf16.msra.mxu0 %v572
    %670 = vmatprep.subr.bf16.mxu0 0
    %671 = vmatpush1.bf16.msra.mxu0 %v571
    %672 = vmatprep.subr.bf16.mxu0 0
    %673 = vmatpush1.bf16.msra.mxu0 %v570
    %674 = vmatprep.subr.bf16.mxu0 0
    %675 = vmatpush2.bf16.msra.mxu0 %v585
    %676 = vmatprep.subr.bf16.mxu0 0
    %677 = vmatpush2.bf16.msra.mxu0 %v584
    %678 = vmatprep.subr.bf16.mxu0 0
    %679 = vmatpush2.bf16.msra.mxu0 %v583
    %680 = vmatprep.subr.bf16.mxu0 0
    %681 = vmatpush2.bf16.msra.mxu0 %v582
    %682 = vmatprep.subr.bf16.mxu0 0
    %683 = vmatpush2.bf16.msra.mxu0 %v581
    %684 = vmatprep.subr.bf16.mxu0 0
    %685 = vmatpush2.bf16.msra.mxu0 %v580
    %686 = vmatprep.subr.bf16.mxu0 0
    %687 = vmatpush2.bf16.msra.mxu0 %v579
    %688 = vmatprep.subr.bf16.mxu0 0
    %689 = vmatpush2.bf16.msra.mxu0 %v578
    %690 = vmatprep.mubr.bf16.mxu0 %v354
    %691 = vmatmul.mubr.bf16.gmra.mxu0 %v353
    %v692 = vpop.f32.mrf.mxu0
    %v693 = vadd.f32 %v653, %v692
    %v694 = vpop.f32.mrf.mxu0
    %v695 = vpop.f32.mrf.mxu0
    %v696 = vpop.f32.mrf.mxu0
    %697 = vdwg.mxu0
    %698 = vst [vmem:[%s5] sm:$0xf] %v693
    // Predicated region
    $region30: #{feed_forward_packed.1} parent=1 // pred_check
      _
    $region31: #{feed_forward_packed.1} parent=1 // pred_check_branch
      %700 = sbr.rel (0) target = $region33
    $region32: #{feed_forward_packed.1} parent=1 // pred_region
      _
    $region33: #{feed_forward_packed.1} parent=1 // pred_fallthru
      _
    // Predicated region
    $region34: #{feed_forward_packed.1} parent=1 // pred_check
      _
    $region35: #{feed_forward_packed.1} parent=1 // pred_check_branch
      %702 = sbr.rel (0) target = $region37
    $region36: #{feed_forward_packed.1} parent=1 // pred_region
      _
    $region37: #{feed_forward_packed.1} parent=1 // pred_fallthru
      _
    %703 = vsyncpa [#allocation3], 1
    %704 = vsyncpa [#allocation5], 1

</llo_original>
